<compile_context>
chip_gen: v6e
topology: v6e:2x2x1
jax: 0.10.0
libtpu: 0.0.40
codegen_flags: <defaults>
</compile_context>

<pallas_src>
import jax
import jax.numpy as jnp
from jax import lax
from jax.experimental import pallas as pl
from jax.experimental.pallas import tpu as pltpu

_EPS = 1e-8  # nn.CosineSimilarity default eps


def _round_up(n: int, m: int) -> int:
    return ((n + m - 1) // m) * m


def _cdiv(a: int, b: int) -> int:
    return (a + b - 1) // b


def _cosine_sim_kernel(rou_ref, x_ref, ct_ref, bias_ref, o_ref):
    # rou_ref : (1, 1)  f32  SMEM scalar
    # x_ref   : (TB, D) streamed batch tile (input dtype)
    # ct_ref  : (D, Kp) pre-normalized, transposed centroids (VMEM-resident)
    # bias_ref: (1, Kp) f32, 0 for valid classes / -inf for K padding (resident)
    x = x_ref[...]
    xf = x.astype(jnp.float32)

    # 1 / max(||x||, eps) via a single EUP rsqrt.
    inv_xn = lax.rsqrt(
        jnp.maximum(jnp.sum(xf * xf, axis=-1, keepdims=True), _EPS * _EPS))  # (TB,1)

    # Pairwise dots on the MXU in native (M,K)x(K,N) layout, f32 accumulation.
    dots = jnp.dot(x, ct_ref[...], preferred_element_type=jnp.float32)       # (TB,Kp)

    # logits = rou * cos; centroid norms were folded into ct on the host.
    scale = rou_ref[0, 0] * inv_xn                                           # (TB,1)
    logits = dots * scale + bias_ref[...]                                    # (TB,Kp)

    # Softmax over the (lane-dense, padded) class axis; exact divide so every
    # valid row sums to 1.
    m = jnp.max(logits, axis=-1, keepdims=True)
    e = jnp.exp(logits - m)
    o_ref[...] = (e / jnp.sum(e, axis=-1, keepdims=True)).astype(o_ref.dtype)


def cosine_sim(x, centroids, rou):
    """Pallas implementation of CosineSim.forward(x, centroids)."""
    B, D = x.shape
    K, Dc = centroids.shape
    assert D == Dc, "feature dims must match"

    Kp = _round_up(K, 128)          # lane-dense class/output dim
    Dl = _round_up(D, 128)          # x tile's in-VMEM lane footprint

    x_isz = jnp.dtype(x.dtype).itemsize
    c_isz = jnp.dtype(centroids.dtype).itemsize

    # --- VMEM-aware batch tile size (chip-specific capacity). ---
    try:
        vmem_cap = int(getattr(pltpu.get_tpu_info(), "vmem_capacity_bytes",
                               64 * 1024 * 1024))
    except Exception:
        vmem_cap = 64 * 1024 * 1024                       # conservative (v7x-sized)
    vmem_limit = min(vmem_cap * 3 // 4, 96 * 1024 * 1024)
    budget = vmem_limit - (4 << 20)                       # compiler scratch headroom

    # Resident inputs (counted double-buffered to be conservative) + per-row tiles.
    fixed = 2 * D * Kp * c_isz + 2 * Kp * 4 + (64 << 10)
    per_row = 2 * Dl * x_isz + 2 * Kp * 4
    avail = budget - fixed
    if avail < 8 * per_row:
        # TODO(synk): tile K with a second "arbitrary" grid axis (two-pass
        # softmax) for very large K*D instead of erroring out.
        raise ValueError(
            "CosineSim Pallas kernel: resident centroids (K=%d, D=%d) do not "
            "fit in VMEM on this chip; K-tiling is not implemented." % (K, D))

    if B <= 8:
        TB = B                                            # full-extent batch block
    else:
        tb = min(1024, avail // per_row, (B // 8) * 8)
        if B > 16:                                        # >= 2 grid steps (megacore)
            tb = min(tb, _round_up(_cdiv(B, 2), 8))
        TB = max(8, (tb // 8) * 8)
    grid = (_cdiv(B, TB),)

    # --- One-time host prep (tiny: O(K*D)). No padded copy of x. ---
    c32 = centroids.astype(jnp.float32)
    c_norm = jnp.linalg.norm(c32, axis=-1, keepdims=True)                 # (K, 1)
    c_hat = (c32 / jnp.maximum(c_norm, _EPS)).astype(centroids.dtype)     # (K, D)
    ct = jnp.zeros((D, Kp), centroids.dtype).at[:, :K].set(c_hat.T)       # (D, Kp)
    bias = jnp.full((1, Kp), -jnp.inf, jnp.float32).at[0, :K].set(0.0)    # (1, Kp)
    rou_arr = jnp.full((1, 1), rou, jnp.float32)

    cost = pl.CostEstimate(
        flops=2 * B * Kp * D,
        transcendentals=B * (Kp + 1),
        bytes_accessed=B * D * x_isz + D * Kp * c_isz + B * Kp * 4,
    )

    out = pl.pallas_call(
        _cosine_sim_kernel,
        out_shape=jax.ShapeDtypeStruct((B, Kp), jnp.float32),
        grid=grid,
        in_specs=[
            pl.BlockSpec(memory_space=pltpu.MemorySpace.SMEM),   # rou scalar
            pl.BlockSpec((TB, D), lambda i: (i, 0)),             # streamed x tiles
            pl.BlockSpec((D, Kp), lambda i: (0, 0)),             # resident c-hat^T
            pl.BlockSpec((1, Kp), lambda i: (0, 0)),             # resident K-pad bias
        ],
        out_specs=pl.BlockSpec((TB, Kp), lambda i: (i, 0)),
        compiler_params=pltpu.CompilerParams(
            dimension_semantics=("parallel",),
            vmem_limit_bytes=vmem_limit,
        ),
        cost_estimate=cost,
    )(rou_arr, x, ct, bias)

    return out[:, :K]


def _reference(x, centroids, rou):
    # Pure-JAX reference mirroring the PyTorch module.
    x32 = x.astype(jnp.float32)
    c32 = centroids.astype(jnp.float32)
    xn = jnp.linalg.norm(x32, axis=-1, keepdims=True)           # (B, 1)
    cn = jnp.linalg.norm(c32, axis=-1, keepdims=True)           # (K, 1)
    dots = x32 @ c32.T                                          # (B, K)
    cos = dots / jnp.maximum(xn * cn.T, _EPS)
    return jax.nn.softmax(rou * cos, axis=1)


if __name__ == "__main__":
    # Small deterministic example consistent with the module: K centroids of
    # dimension D, batch of B feature vectors.
    B, D, K = 8, 32, 4
    ROU = 2.0

    key = jax.random.PRNGKey(0)
    kx, kc = jax.random.split(key)
    x = jax.random.normal(kx, (B, D), dtype=jnp.float32)
    centroids = jax.random.normal(kc, (K, D), dtype=jnp.float32)

    out = cosine_sim(x, centroids, ROU)
    out = jax.block_until_ready(out)

    ref = _reference(x, centroids, ROU)
    assert out.shape == (B, K)
    assert jnp.allclose(out, ref, atol=5e-3, rtol=5e-3), "mismatch vs reference"
    # Exact divide in the softmax normalization: rows sum to ~1.
    assert jnp.allclose(jnp.sum(out, axis=1), jnp.ones((B,)), atol=1e-3)

    print("KERNEL_OK")
</pallas_src>

<mosaic_0001>
module attributes {stable_mosaic.version = 11 : i64} {
  func.func @_cosine_sim_kernel(%arg0: i32, %arg1: memref<1x1xf32, #tpu.memory_space<smem>>, %arg2: memref<8x32xf32, #tpu.memory_space<vmem>>, %arg3: memref<32x128xf32, #tpu.memory_space<vmem>>, %arg4: memref<1x128xf32, #tpu.memory_space<vmem>>, %arg5: memref<8x128xf32, #tpu.memory_space<vmem>>) attributes {dimension_semantics = [#tpu.dimension_semantics<parallel>], iteration_bounds = array<i64: 1>, scalar_prefetch = 0 : i64, scratch_operands = 0 : i64, tpu.core_type = #tpu.core_type<tc>, window_params = [{transform_indices = @transform_0, window_bounds = array<i64: 1, 1>}, {transform_indices = @transform_1, window_bounds = array<i64: 8, 32>}, {pipeline_mode = #tpu.pipeline_mode<synchronous>, transform_indices = @transform_2, window_bounds = array<i64: 32, 128>}, {pipeline_mode = #tpu.pipeline_mode<synchronous>, transform_indices = @transform_3, window_bounds = array<i64: 1, 128>}, {transform_indices = @transform_4, window_bounds = array<i64: 8, 128>}]} {
    %c0 = arith.constant 0 : index
    %c0_0 = arith.constant 0 : index
    %0 = vector.load %arg2[%c0, %c0_0] : memref<8x32xf32, #tpu.memory_space<vmem>>, vector<8x32xf32>
    %1 = arith.mulf %0, %0 : vector<8x32xf32>
    %cst = arith.constant dense<0.000000e+00> : vector<8xf32>
    %2 = vector.multi_reduction <add>, %1, %cst [1] : vector<8x32xf32> to vector<8xf32>
    %3 = vector.shape_cast %2 : vector<8xf32> to vector<8x1xf32>
    %cst_1 = arith.constant 1.000000e-16 : f32
    %4 = vector.broadcast %cst_1 : f32 to vector<8x1xf32>
    %5 = arith.maximumf %3, %4 : vector<8x1xf32>
    %6 = math.rsqrt %5 : vector<8x1xf32>
    %c0_2 = arith.constant 0 : index
    %c0_3 = arith.constant 0 : index
    %7 = vector.load %arg3[%c0_2, %c0_3] : memref<32x128xf32, #tpu.memory_space<vmem>>, vector<32x128xf32>
    %cst_4 = arith.constant dense<0.000000e+00> : vector<8x128xf32>
    %8 = tpu.matmul %0, %7, %cst_4 {dimension_numbers = #tpu.dot_dimension_numbers<[1], [0], [0], [1], [0, 0, 1, 1], [], []>} : vector<8x32xf32>, vector<32x128xf32>, vector<8x128xf32> -> vector<8x128xf32>
    %c0_5 = arith.constant 0 : index
    %c0_6 = arith.constant 0 : index
    %9 = memref.load %arg1[%c0_5, %c0_6] : memref<1x1xf32, #tpu.memory_space<smem>>
    %10 = vector.broadcast %9 : f32 to vector<8x1xf32>
    %11 = arith.mulf %10, %6 : vector<8x1xf32>
    %12 = vector.broadcast %11 : vector<8x1xf32> to vector<8x128xf32>
    %13 = arith.mulf %8, %12 : vector<8x128xf32>
    %c0_7 = arith.constant 0 : index
    %c0_8 = arith.constant 0 : index
    %14 = vector.load %arg4[%c0_7, %c0_8] : memref<1x128xf32, #tpu.memory_space<vmem>>, vector<1x128xf32>
    %15 = vector.broadcast %14 : vector<1x128xf32> to vector<8x128xf32>
    %16 = arith.addf %13, %15 : vector<8x128xf32>
    %cst_9 = arith.constant dense<0xFF800000> : vector<8xf32>
    %17 = vector.multi_reduction <maximumf>, %16, %cst_9 [1] : vector<8x128xf32> to vector<8xf32>
    %18 = vector.shape_cast %17 : vector<8xf32> to vector<8x1xf32>
    %19 = vector.broadcast %18 : vector<8x1xf32> to vector<8x128xf32>
    %20 = arith.subf %16, %19 : vector<8x128xf32>
    %21 = math.exp %20 : vector<8x128xf32>
    %cst_10 = arith.constant dense<0.000000e+00> : vector<8xf32>
    %22 = vector.multi_reduction <add>, %21, %cst_10 [1] : vector<8x128xf32> to vector<8xf32>
    %23 = vector.shape_cast %22 : vector<8xf32> to vector<8x1xf32>
    %24 = vector.broadcast %23 : vector<8x1xf32> to vector<8x128xf32>
    %25 = arith.divf %21, %24 : vector<8x128xf32>
    %c0_11 = arith.constant 0 : index
    %c0_12 = arith.constant 0 : index
    %26 = vector.load %arg5[%c0_11, %c0_12] : memref<8x128xf32, #tpu.memory_space<vmem>>, vector<8x128xf32>
    tpu.vector_store %arg5[%c0_11, %c0_12], %25 {strides = array<i32>} : memref<8x128xf32, #tpu.memory_space<vmem>>, vector<8x128xf32>,
    return
  }
  func.func @transform_0(%arg0: i32) -> (i32, i32) {
    %c0_i32 = arith.constant 0 : i32
    %c0_i32_0 = arith.constant 0 : i32
    %c0_i32_1 = arith.constant 0 : i32
    return %c0_i32, %c0_i32_0 : i32, i32
  }
  func.func @transform_1(%arg0: i32) -> (i32, i32) {
    %c0_i32 = arith.constant 0 : i32
    %c0_i32_0 = arith.constant 0 : i32
    return %arg0, %c0_i32 : i32, i32
  }
  func.func @transform_2(%arg0: i32) -> (i32, i32) {
    %c0_i32 = arith.constant 0 : i32
    %c0_i32_0 = arith.constant 0 : i32
    %c0_i32_1 = arith.constant 0 : i32
    return %c0_i32, %c0_i32_0 : i32, i32
  }
  func.func @transform_3(%arg0: i32) -> (i32, i32) {
    %c0_i32 = arith.constant 0 : i32
    %c0_i32_0 = arith.constant 0 : i32
    %c0_i32_1 = arith.constant 0 : i32
    return %c0_i32, %c0_i32_0 : i32, i32
  }
  func.func @transform_4(%arg0: i32) -> (i32, i32) {
    %c0_i32 = arith.constant 0 : i32
    %c0_i32_0 = arith.constant 0 : i32
    return %arg0, %c0_i32 : i32, i32
  }
}

</mosaic_0001>

<llo_original>
// kernel: tpu_custom_call.1
$region0: #{tpu_custom_call.1}
  #allocation0 [shape = 'u32[]', space=smem, size = 0x4, offset = 0x4, fixed_abs, tag = 'smem constant byte address 0x4 - core index']
  #allocation1 [shape = 'u32[144,128]{1,0:T(1,128)}', space=vmem, size = 0x12000, scoped, tag = 'internal scratch']
  #allocation2 [shape = 'f32[1,1]{1,0:T(1,128)S(6)}', space=smem, size = 0x200, scoped, tag = 'scoped memory for tpu_custom_call.1']
  %s0 = inlined_call_operand.<no memory space> [shape: f32[1,1], index: 0, kind: input, shape index: {}]
  %s1 = inlined_call_operand.hbm [shape: f32[8,32], index: 1, kind: input, shape index: {}]
  %s2 = inlined_call_operand.hbm [shape: f32[32,128], index: 2, kind: input, shape index: {}]
  %s3 = inlined_call_operand.vmem [shape: f32[1,128], index: 3, kind: input, shape index: {}]
  %s4 = inlined_call_operand.hbm [shape: f32[8,128], index: 4, kind: output, shape index: {}]
  %s5 = sld [smem:[#allocation0]]
  $region34: #{tpu_custom_call.1} parent=0
    _
  %s7 = ssub.s32 1, %s5
  %s8 = scalar_select 0, %s7, %s5
  %9 = sst [smem:[#allocation2]] %s0
  $region1: #{tpu_custom_call.1} parent=0
    #allocation3 [shape = 'u8[4096]{0}', space=vmem, size = 0x1000, scoped, tag = 'input window, operand 1, single buffered']
    #allocation4 [shape = 's32[1]{0}', space=sflag, size = 0x4, scoped, tag = 'scoped memory for tpu_custom_call.1']
    #allocation5 [shape = 's32[1]{0}', space=sflag, size = 0x4, scoped, tag = 'scoped memory for tpu_custom_call.1']
    #allocation6 [shape = 'u8[16384]{0}', space=vmem, size = 0x4000, scoped, tag = 'input window, operand 2, single buffered']
    #allocation7 [shape = 's32[1]{0}', space=sflag, size = 0x4, scoped, tag = 'scoped memory for tpu_custom_call.1']
    #allocation8 [shape = 'u8[4096]{0}', space=vmem, size = 0x1000, scoped, tag = 'output window, operand 0, single buffered']
    %10 = vsyncpa [#allocation4], 0
    %11 = vsyncpa [#allocation7], 0
    %12 = vsyncpa [#allocation5], 0
    // Predicated region
    $region2: #{tpu_custom_call.1} parent=1 // pred_check
      _
    $region3: #{tpu_custom_call.1} parent=1 // pred_check_branch
      %14 = sbr.rel (0) target = $region5
    $region4: #{tpu_custom_call.1} parent=1 // pred_region
      _
    $region5: #{tpu_custom_call.1} parent=1 // pred_fallthru
      _
    // Predicated region
    $region6: #{tpu_custom_call.1} parent=1 // pred_check
      _
    $region7: #{tpu_custom_call.1} parent=1 // pred_check_branch
      %16 = sbr.rel (0) target = $region9
    $region8: #{tpu_custom_call.1} parent=1 // pred_region
      %s18 = ssub.s32 128, 128
      %19 = vsyncadd [#allocation4], %s18
      %s21 = sshll.u32 [#allocation3], 4
      %s22 = int_to_ptr.vmem [resolvable:$true] %s21
      %24 = dma.hbm_to_vmem [thread:$0]  %s1, 128, %s22, [#allocation4]
    $region9: #{tpu_custom_call.1} parent=1 // pred_fallthru
      _
    // Predicated region
    $region10: #{tpu_custom_call.1} parent=1 // pred_check
      _
    $region11: #{tpu_custom_call.1} parent=1 // pred_check_branch
      %26 = sbr.rel (0) target = $region13
    $region12: #{tpu_custom_call.1} parent=1 // pred_region
      %s28 = ssub.s32 512, 512
      %29 = vsyncadd [#allocation7], %s28
      %s30 = sshll.u32 [#allocation6], 4
      %s31 = int_to_ptr.vmem [resolvable:$true] %s30
      %36 = dma.hbm_to_vmem [thread:$0]  %s2, 512, %s31, [#allocation7], 128, 128, 8
    $region13: #{tpu_custom_call.1} parent=1 // pred_fallthru
      _
    // Predicated region
    $region14: #{tpu_custom_call.1} parent=1 // pred_check
      _
    $region15: #{tpu_custom_call.1} parent=1 // pred_check_branch
      %38 = sbr.rel (0) target = $region17
    $region16: #{tpu_custom_call.1} parent=1 // pred_region
      _
    $region17: #{tpu_custom_call.1} parent=1 // pred_fallthru
      _
    // Predicated region
    $region18: #{tpu_custom_call.1} parent=1 // pred_check
      _
    $region19: #{tpu_custom_call.1} parent=1 // pred_check_branch
      %40 = sbr.rel (0) target = $region21
    $region20: #{tpu_custom_call.1} parent=1 // pred_region
      %41 = dma.done [#allocation4], 128
    $region21: #{tpu_custom_call.1} parent=1 // pred_fallthru
      _
    // Predicated region
    $region22: #{tpu_custom_call.1} parent=1 // pred_check
      _
    $region23: #{tpu_custom_call.1} parent=1 // pred_check_branch
      %43 = sbr.rel (0) target = $region25
    $region24: #{tpu_custom_call.1} parent=1 // pred_region
      %44 = dma.done [#allocation7], 512
    $region25: #{tpu_custom_call.1} parent=1 // pred_fallthru
      _
    %v45 = vld [vmem:[#allocation3] sm:$0xff]
    %v46 = vmul.f32 %v45, %v45
    %vm47 = vcmask 261120
    %v48 = vsel %vm47, %v46, 0.0
    %49 = vadd.xlane.f32.xlu0 %v48
    %v50 = vpop.xlane.xlu0 %49
    %v51 = vmax.f32 %v50, 1e-16
    %v52 = vrsqrt.pop %v51
    %v53 = vld [vmem:[#allocation6] sm:$0xff]
    %v54 = vld [vmem:[#allocation6 + $0x8] sm:$0xff]
    %v55 = vld [vmem:[#allocation6 + $0x10] sm:$0xff]
    %v56 = vld [vmem:[#allocation6 + $0x18] sm:$0xff]
    %v58 = vsel %vm47, %v45, 0
    %60 = vmatprep.subr.mxu0 0.0
    %61 = vmatpush1.msra.mxu0 0.0
    %62 = vmatprep.subr.mxu0 0.0
    %63 = vmatpush1.msra.mxu0 0.0
    %64 = vmatprep.subr.mxu0 0.0
    %65 = vmatpush1.msra.mxu0 0.0
    %66 = vmatprep.subr.mxu0 0.0
    %67 = vmatpush1.msra.mxu0 0.0
    %68 = vmatprep.subr.mxu0 0.0
    %69 = vmatpush1.msra.mxu0 0.0
    %70 = vmatprep.subr.mxu0 0.0
    %71 = vmatpush1.msra.mxu0 0.0
    %72 = vmatprep.subr.mxu0 0.0
    %73 = vmatpush1.msra.mxu0 0.0
    %74 = vmatprep.subr.mxu0 0.0
    %75 = vmatpush1.msra.mxu0 0.0
    %76 = vmatprep.subr.mxu0 0.0
    %77 = vmatpush1.msra.mxu0 0.0
    %78 = vmatprep.subr.mxu0 0.0
    %79 = vmatpush1.msra.mxu0 0.0
    %80 = vmatprep.subr.mxu0 0.0
    %81 = vmatpush1.msra.mxu0 0.0
    %82 = vmatprep.subr.mxu0 0.0
    %83 = vmatpush1.msra.mxu0 0.0
    %84 = vmatprep.subr.mxu0 0.0
    %85 = vmatpush1.msra.mxu0 %v56
    %86 = vmatprep.subr.mxu0 0.0
    %87 = vmatpush1.msra.mxu0 %v55
    %88 = vmatprep.subr.mxu0 0.0
    %89 = vmatpush1.msra.mxu0 %v54
    %90 = vmatprep.subr.mxu0 0.0
    %91 = vmatpush1.msra.mxu0 %v53
    %92 = vmatprep.subr.mxu0 0.0
    %93 = vmatpush2.msra.mxu0 0.0
    %94 = vmatprep.subr.mxu0 0.0
    %95 = vmatpush2.msra.mxu0 0.0
    %96 = vmatprep.subr.mxu0 0.0
    %97 = vmatpush2.msra.mxu0 0.0
    %98 = vmatprep.subr.mxu0 0.0
    %99 = vmatpush2.msra.mxu0 0.0
    %100 = vmatprep.subr.mxu0 0.0
    %101 = vmatpush2.msra.mxu0 0.0
    %102 = vmatprep.subr.mxu0 0.0
    %103 = vmatpush2.msra.mxu0 0.0
    %104 = vmatprep.subr.mxu0 0.0
    %105 = vmatpush2.msra.mxu0 0.0
    %106 = vmatprep.subr.mxu0 0.0
    %107 = vmatpush2.msra.mxu0 0.0
    %108 = vmatprep.subr.mxu0 0.0
    %109 = vmatpush2.msra.mxu0 0.0
    %110 = vmatprep.subr.mxu0 0.0
    %111 = vmatpush2.msra.mxu0 0.0
    %112 = vmatprep.subr.mxu0 0.0
    %113 = vmatpush2.msra.mxu0 0.0
    %114 = vmatprep.subr.mxu0 0.0
    %115 = vmatpush2.msra.mxu0 0.0
    %116 = vmatprep.subr.mxu0 0.0
    %117 = vmatpush2.msra.mxu0 0.0
    %118 = vmatprep.subr.mxu0 0.0
    %119 = vmatpush2.msra.mxu0 0.0
    %120 = vmatprep.subr.mxu0 0.0
    %121 = vmatpush2.msra.mxu0 0.0
    %122 = vmatprep.subr.mxu0 0.0
    %123 = vmatpush2.msra.mxu0 0.0
    %124 = vmatprep.mubr.f32.mxu0 0.0
    %125 = vmatmul.mubr.f32.gmra.mxu0 %v58
    %v126 = vpop.f32.mrf.mxu0
    %v127 = vadd.f32 0.0, %v126
    %v128 = vpop.f32.mrf.mxu0
    %129 = vdwg.mxu0
    %s130 = sld [smem:[#allocation2]]
    %v131 = vstv %s130
    %v132 = vmul.f32 %v131, %v52
    %v133 = vmul.f32 %v127, %v132
    %v134 = vld [vmem:[%s3] sm:$0x1]
    %v136 = vlaneseq
    %v137 = vshrl.u32 %v136, 7
    %v138 = vsub.s32 0, %v137
    %v139 = vrot.slane %v134, %v138
    %v141 = vadd.f32 %v133, %v139
    %142 = vmax.xlane.f32.xlu0 %v141
    %v143 = vpop.xlane.xlu0 %142
    %v144 = vsub.f32 %v141, %v143
    %v145 = vmul.f32 %v144, 1.442695
    %v146 = vpow.pop %v145
    %147 = vadd.xlane.f32.xlu0 %v146
    %v148 = vpop.xlane.xlu0 %147
    %v149 = vrcp.pop %v148
    %v150 = vmul.f32 %v146, %v149
    %151 = vst [vmem:[#allocation8] sm:$0xff] %v150
    // Predicated region
    $region26: #{tpu_custom_call.1} parent=1 // pred_check
      _
    $region27: #{tpu_custom_call.1} parent=1 // pred_check_branch
      %153 = sbr.rel (0) target = $region29
    $region28: #{tpu_custom_call.1} parent=1 // pred_region
      %s155 = ssub.s32 128, 128
      %156 = vsyncadd [#allocation5], %s155
      %s158 = sshll.u32 [#allocation8], 4
      %s159 = int_to_ptr.vmem [resolvable:$true] %s158
      %161 = dma.vmem_to_hbm [thread:$0]  %s159, 128, %s4, [#allocation5]
    $region29: #{tpu_custom_call.1} parent=1 // pred_fallthru
      _
    // Predicated region
    $region30: #{tpu_custom_call.1} parent=1 // pred_check
      _
    $region31: #{tpu_custom_call.1} parent=1 // pred_check_branch
      %163 = sbr.rel (0) target = $region33
    $region32: #{tpu_custom_call.1} parent=1 // pred_region
      %164 = dma.done [#allocation5], 128
    $region33: #{tpu_custom_call.1} parent=1 // pred_fallthru
      _
    %165 = vsyncpa [#allocation4], 1
    %166 = vsyncpa [#allocation7], 1
    %167 = vsyncpa [#allocation5], 1

</llo_original>
